<compile_context>
chip_gen: v5e
topology: v5e:2x2
jax: 0.10.0
libtpu: 0.0.40
codegen_flags: <defaults>
</compile_context>

<pallas_src>
import numpy as np
import jax
import jax.numpy as jnp
from jax.experimental import pallas as pl
from jax.experimental.pallas import tpu as pltpu

# ---------------- synthetic skeleton / hyper-params (opt) ----------------
N_NODES   = 8                                  # joints in the synthetic skeleton
EDGES     = [[0, 1], [1, 2], [2, 3], [0, 4], [4, 5], [5, 6], [6, 7]]
B         = 2                                  # batch
D_IN      = 16                                 # opt.d_in
W_HID     = 32                                 # opt.W
DEPTH     = 4                                  # opt.D  (number of GCN layers)
D_OUT     = 8                                  # opt.d_out
MASK_ROOT = True                               # opt.mask_root
ROOT_ID   = 0
INIT_ADJ_W = 0.05
# TODO(synk): rigid_idxs slicing before the last layer is skipped
# (keep_extra_joint=True); with slicing the reference module shape-mismatches anyway.


def skeleton_to_graph_np(edges):
    """adjacency matrix with self loops (same as skeleton_to_graph)."""
    n = int(np.max(edges)) + 1
    adj = np.eye(n, dtype=np.float32)
    for a, b in edges:
        adj[a, b] = 1.0
        adj[b, a] = 1.0
    return adj


# ---------------- Pallas kernel: whole GNN fused, single grid point ----------------
def make_gnn_kernel(depth):
    def kernel(*refs):
        # refs = (x_flat, [M_i, bias_i] * depth, out_flat)
        x_ref = refs[0]             # (B, N*C_in)
        o_ref = refs[-1]            # (B, N*C_out_last)
        layer_refs = refs[1:-1]

        n = x_ref[...]              # (B, N*C_in) f32, all batch rows at once
        for i in range(depth):
            m_ref, b_ref = layer_refs[2 * i: 2 * i + 2]
            # folded per-node linear + adjacency aggregation: one MXU matmul.
            out = jnp.dot(n, m_ref[...], preferred_element_type=jnp.float32)
            out = out + b_ref[...]                 # DenseWGCN bias (1, N*C_out)
            if i + 1 < depth:
                out = jnp.maximum(out, 0.0)        # F.relu between layers
            n = out

        o_ref[...] = n.astype(o_ref.dtype)
    return kernel


def basic_gnn_forward(x, folded_params):
    """x: (B, N, C_in) f32; folded_params: list of (M, bias_flat)."""
    Bn, N, cin = x.shape
    depth = len(folded_params)
    x_flat = x.reshape(Bn, N * cin)                # lane-dense input (2, 128)

    in_specs = [pl.BlockSpec((Bn, N * cin), lambda i: (0, 0))]
    inputs = [x_flat]
    for (M, bflat) in folded_params:
        in_specs += [
            pl.BlockSpec(M.shape, lambda i: (0, 0)),
            pl.BlockSpec(bflat.shape, lambda i: (0, 0)),
        ]
        inputs += [M, bflat]

    n_out_flat = folded_params[-1][0].shape[1]     # N * d_out

    out_flat = pl.pallas_call(
        make_gnn_kernel(depth),
        out_shape=jax.ShapeDtypeStruct((Bn, n_out_flat), jnp.float32),
        grid=(1,),                                 # batch grid collapsed: one invocation
        in_specs=in_specs,
        out_specs=pl.BlockSpec((Bn, n_out_flat), lambda i: (0, 0)),
        compiler_params=pltpu.CompilerParams(dimension_semantics=("arbitrary",)),
    )(*inputs)

    return out_flat.reshape(Bn, N, n_out_flat // N)


# ---------------- deterministic parameter construction ----------------
def init_params(key, adj_np):
    adj = jnp.asarray(adj_np)                                   # (N, N), diag = 1
    dims = [D_IN] + [W_HID] * (DEPTH - 1) + [D_OUT]             # d_in -> W.. -> d_out
    eye_idx = jnp.arange(N_NODES)
    params = []
    for i in range(DEPTH):
        cin, cout = dims[i], dims[i + 1]
        key, kw, ka = jax.random.split(key, 3)
        # ParallelLinear: kaiming_uniform_(weight[n].T, a=sqrt(5)) -> U(-1/sqrt(cin), 1/sqrt(cin))
        bound = 1.0 / np.sqrt(cin)
        w = jax.random.uniform(kw, (N_NODES, cin, cout), jnp.float32, -bound, bound)
        # DenseWGCN adj_w init: adj * clamp(init_w + (rand-0.5)*0.1, 0.01, 1.0), diag = 1
        perturb = (jax.random.uniform(ka, (N_NODES, N_NODES), jnp.float32) - 0.5) * 0.1
        adj_w = adj * jnp.clip(INIT_ADJ_W + perturb, 0.01, 1.0)
        adj_w = adj_w.at[eye_idx, eye_idx].set(1.0)
        adjw_eff = adj_w * adj                                  # get_adjw()
        bias = jnp.zeros((1, cout), jnp.float32)                # DenseWGCN bias (zeros)
        params.append((w, adjw_eff, bias))
    return params


def fold_params(params, mask=None):
    """Fold adjacency + mask into per-layer matmul weights.

    M[k*cin + l, n*cout + j] = adjw[n, k] * W[k, l, j]
    bias_flat[0, n*cout + j] = bias[0, j]
    """
    folded = []
    for i, (w, adjw, bias) in enumerate(params):
        N, cin, cout = w.shape
        M = jnp.einsum('nk,klj->klnj', adjw, w).reshape(N * cin, N * cout)
        if i == 0 and mask is not None:
            # mask_root: zero the root node's C_in rows of the first folded weight.
            mrows = jnp.repeat(mask[:, 0], cin)                 # (N*cin,)
            M = M * mrows[:, None]
        bias_flat = jnp.tile(bias, (1, N))                      # (1, N*cout)
        folded.append((M, bias_flat))
    return folded


# ---------------- pure-JAX reference (for correctness check) ----------------
def reference_forward(x, mask, params):
    n = x * mask[None]                                          # (B,N,C) * (1,N,1)
    for i, (w, a, b) in enumerate(params):
        h = jnp.einsum('bkl,klj->bkj', n, w)
        out = jnp.einsum('nm,bmj->bnj', a, h) + b[None]
        if i + 1 < len(params):
            out = jax.nn.relu(out)
        n = out
    return n


if __name__ == "__main__":
    key = jax.random.PRNGKey(0)
    key, kx = jax.random.split(key)

    adj_np = skeleton_to_graph_np(EDGES)
    params = init_params(key, adj_np)

    mask = jnp.ones((N_NODES, 1), jnp.float32)
    if MASK_ROOT:
        mask = mask.at[ROOT_ID, 0].set(0.0)

    x = jax.random.normal(kx, (B, N_NODES, D_IN), jnp.float32)

    folded = fold_params(params, mask if MASK_ROOT else None)

    out = basic_gnn_forward(x, folded)
    out = jax.block_until_ready(out)

    ref = jax.block_until_ready(reference_forward(x, mask, params))
    np.testing.assert_allclose(np.asarray(out), np.asarray(ref), rtol=1e-5, atol=1e-5)
    assert out.shape == (B, N_NODES, D_OUT)

    print("KERNEL_OK")
</pallas_src>

<mosaic_0001>
module attributes {stable_mosaic.version = 11 : i64} {
  func.func @kernel(%arg0: i32, %arg1: memref<2x128xf32, #tpu.memory_space<vmem>>, %arg2: memref<128x256xf32, #tpu.memory_space<vmem>>, %arg3: memref<1x256xf32, #tpu.memory_space<vmem>>, %arg4: memref<256x256xf32, #tpu.memory_space<vmem>>, %arg5: memref<1x256xf32, #tpu.memory_space<vmem>>, %arg6: memref<256x256xf32, #tpu.memory_space<vmem>>, %arg7: memref<1x256xf32, #tpu.memory_space<vmem>>, %arg8: memref<256x64xf32, #tpu.memory_space<vmem>>, %arg9: memref<1x64xf32, #tpu.memory_space<vmem>>, %arg10: memref<2x64xf32, #tpu.memory_space<vmem>>) attributes {dimension_semantics = [#tpu.dimension_semantics<arbitrary>], iteration_bounds = array<i64: 1>, scalar_prefetch = 0 : i64, scratch_operands = 0 : i64, tpu.core_type = #tpu.core_type<tc>, window_params = [{pipeline_mode = #tpu.pipeline_mode<synchronous>, transform_indices = @transform_0, window_bounds = array<i64: 2, 128>}, {pipeline_mode = #tpu.pipeline_mode<synchronous>, transform_indices = @transform_1, window_bounds = array<i64: 128, 256>}, {pipeline_mode = #tpu.pipeline_mode<synchronous>, transform_indices = @transform_2, window_bounds = array<i64: 1, 256>}, {pipeline_mode = #tpu.pipeline_mode<synchronous>, transform_indices = @transform_3, window_bounds = array<i64: 256, 256>}, {pipeline_mode = #tpu.pipeline_mode<synchronous>, transform_indices = @transform_4, window_bounds = array<i64: 1, 256>}, {pipeline_mode = #tpu.pipeline_mode<synchronous>, transform_indices = @transform_5, window_bounds = array<i64: 256, 256>}, {pipeline_mode = #tpu.pipeline_mode<synchronous>, transform_indices = @transform_6, window_bounds = array<i64: 1, 256>}, {pipeline_mode = #tpu.pipeline_mode<synchronous>, transform_indices = @transform_7, window_bounds = array<i64: 256, 64>}, {pipeline_mode = #tpu.pipeline_mode<synchronous>, transform_indices = @transform_8, window_bounds = array<i64: 1, 64>}, {pipeline_mode = #tpu.pipeline_mode<synchronous>, transform_indices = @transform_9, window_bounds = array<i64: 2, 64>}]} {
    %c0 = arith.constant 0 : index
    %c0_0 = arith.constant 0 : index
    %0 = vector.load %arg1[%c0, %c0_0] : memref<2x128xf32, #tpu.memory_space<vmem>>, vector<2x128xf32>
    %c0_1 = arith.constant 0 : index
    %c0_2 = arith.constant 0 : index
    %1 = vector.load %arg2[%c0_1, %c0_2] : memref<128x256xf32, #tpu.memory_space<vmem>>, vector<128x256xf32>
    %cst = arith.constant dense<0.000000e+00> : vector<2x256xf32>
    %2 = tpu.matmul %0, %1, %cst {dimension_numbers = #tpu.dot_dimension_numbers<[1], [0], [0], [1], [0, 0, 1, 1], [], []>} : vector<2x128xf32>, vector<128x256xf32>, vector<2x256xf32> -> vector<2x256xf32>
    %c0_3 = arith.constant 0 : index
    %c0_4 = arith.constant 0 : index
    %3 = vector.load %arg3[%c0_3, %c0_4] : memref<1x256xf32, #tpu.memory_space<vmem>>, vector<1x256xf32>
    %4 = vector.broadcast %3 : vector<1x256xf32> to vector<2x256xf32>
    %5 = arith.addf %2, %4 : vector<2x256xf32>
    %cst_5 = arith.constant 0.000000e+00 : f32
    %6 = vector.broadcast %cst_5 : f32 to vector<2x256xf32>
    %7 = arith.maximumf %5, %6 : vector<2x256xf32>
    %c0_6 = arith.constant 0 : index
    %c0_7 = arith.constant 0 : index
    %8 = vector.load %arg4[%c0_6, %c0_7] : memref<256x256xf32, #tpu.memory_space<vmem>>, vector<256x256xf32>
    %cst_8 = arith.constant dense<0.000000e+00> : vector<2x256xf32>
    %9 = tpu.matmul %7, %8, %cst_8 {dimension_numbers = #tpu.dot_dimension_numbers<[1], [0], [0], [1], [0, 0, 1, 1], [], []>} : vector<2x256xf32>, vector<256x256xf32>, vector<2x256xf32> -> vector<2x256xf32>
    %c0_9 = arith.constant 0 : index
    %c0_10 = arith.constant 0 : index
    %10 = vector.load %arg5[%c0_9, %c0_10] : memref<1x256xf32, #tpu.memory_space<vmem>>, vector<1x256xf32>
    %11 = vector.broadcast %10 : vector<1x256xf32> to vector<2x256xf32>
    %12 = arith.addf %9, %11 : vector<2x256xf32>
    %cst_11 = arith.constant 0.000000e+00 : f32
    %13 = vector.broadcast %cst_11 : f32 to vector<2x256xf32>
    %14 = arith.maximumf %12, %13 : vector<2x256xf32>
    %c0_12 = arith.constant 0 : index
    %c0_13 = arith.constant 0 : index
    %15 = vector.load %arg6[%c0_12, %c0_13] : memref<256x256xf32, #tpu.memory_space<vmem>>, vector<256x256xf32>
    %cst_14 = arith.constant dense<0.000000e+00> : vector<2x256xf32>
    %16 = tpu.matmul %14, %15, %cst_14 {dimension_numbers = #tpu.dot_dimension_numbers<[1], [0], [0], [1], [0, 0, 1, 1], [], []>} : vector<2x256xf32>, vector<256x256xf32>, vector<2x256xf32> -> vector<2x256xf32>
    %c0_15 = arith.constant 0 : index
    %c0_16 = arith.constant 0 : index
    %17 = vector.load %arg7[%c0_15, %c0_16] : memref<1x256xf32, #tpu.memory_space<vmem>>, vector<1x256xf32>
    %18 = vector.broadcast %17 : vector<1x256xf32> to vector<2x256xf32>
    %19 = arith.addf %16, %18 : vector<2x256xf32>
    %cst_17 = arith.constant 0.000000e+00 : f32
    %20 = vector.broadcast %cst_17 : f32 to vector<2x256xf32>
    %21 = arith.maximumf %19, %20 : vector<2x256xf32>
    %c0_18 = arith.constant 0 : index
    %c0_19 = arith.constant 0 : index
    %22 = vector.load %arg8[%c0_18, %c0_19] : memref<256x64xf32, #tpu.memory_space<vmem>>, vector<256x64xf32>
    %cst_20 = arith.constant dense<0.000000e+00> : vector<2x64xf32>
    %23 = tpu.matmul %21, %22, %cst_20 {dimension_numbers = #tpu.dot_dimension_numbers<[1], [0], [0], [1], [0, 0, 1, 1], [], []>} : vector<2x256xf32>, vector<256x64xf32>, vector<2x64xf32> -> vector<2x64xf32>
    %c0_21 = arith.constant 0 : index
    %c0_22 = arith.constant 0 : index
    %24 = vector.load %arg9[%c0_21, %c0_22] : memref<1x64xf32, #tpu.memory_space<vmem>>, vector<1x64xf32>
    %25 = vector.broadcast %24 : vector<1x64xf32> to vector<2x64xf32>
    %26 = arith.addf %23, %25 : vector<2x64xf32>
    %c0_23 = arith.constant 0 : index
    %c0_24 = arith.constant 0 : index
    %27 = vector.load %arg10[%c0_23, %c0_24] : memref<2x64xf32, #tpu.memory_space<vmem>>, vector<2x64xf32>
    tpu.vector_store %arg10[%c0_23, %c0_24], %26 {strides = array<i32>} : memref<2x64xf32, #tpu.memory_space<vmem>>, vector<2x64xf32>,
    return
  }
  func.func @transform_0(%arg0: i32) -> (i32, i32) {
    %c0_i32 = arith.constant 0 : i32
    %c0_i32_0 = arith.constant 0 : i32
    %c0_i32_1 = arith.constant 0 : i32
    return %c0_i32, %c0_i32_0 : i32, i32
  }
  func.func @transform_1(%arg0: i32) -> (i32, i32) {
    %c0_i32 = arith.constant 0 : i32
    %c0_i32_0 = arith.constant 0 : i32
    %c0_i32_1 = arith.constant 0 : i32
    return %c0_i32, %c0_i32_0 : i32, i32
  }
  func.func @transform_2(%arg0: i32) -> (i32, i32) {
    %c0_i32 = arith.constant 0 : i32
    %c0_i32_0 = arith.constant 0 : i32
    %c0_i32_1 = arith.constant 0 : i32
    return %c0_i32, %c0_i32_0 : i32, i32
  }
  func.func @transform_3(%arg0: i32) -> (i32, i32) {
    %c0_i32 = arith.constant 0 : i32
    %c0_i32_0 = arith.constant 0 : i32
    %c0_i32_1 = arith.constant 0 : i32
    return %c0_i32, %c0_i32_0 : i32, i32
  }
  func.func @transform_4(%arg0: i32) -> (i32, i32) {
    %c0_i32 = arith.constant 0 : i32
    %c0_i32_0 = arith.constant 0 : i32
    %c0_i32_1 = arith.constant 0 : i32
    return %c0_i32, %c0_i32_0 : i32, i32
  }
  func.func @transform_5(%arg0: i32) -> (i32, i32) {
    %c0_i32 = arith.constant 0 : i32
    %c0_i32_0 = arith.constant 0 : i32
    %c0_i32_1 = arith.constant 0 : i32
    return %c0_i32, %c0_i32_0 : i32, i32
  }
  func.func @transform_6(%arg0: i32) -> (i32, i32) {
    %c0_i32 = arith.constant 0 : i32
    %c0_i32_0 = arith.constant 0 : i32
    %c0_i32_1 = arith.constant 0 : i32
    return %c0_i32, %c0_i32_0 : i32, i32
  }
  func.func @transform_7(%arg0: i32) -> (i32, i32) {
    %c0_i32 = arith.constant 0 : i32
    %c0_i32_0 = arith.constant 0 : i32
    %c0_i32_1 = arith.constant 0 : i32
    return %c0_i32, %c0_i32_0 : i32, i32
  }
  func.func @transform_8(%arg0: i32) -> (i32, i32) {
    %c0_i32 = arith.constant 0 : i32
    %c0_i32_0 = arith.constant 0 : i32
    %c0_i32_1 = arith.constant 0 : i32
    return %c0_i32, %c0_i32_0 : i32, i32
  }
  func.func @transform_9(%arg0: i32) -> (i32, i32) {
    %c0_i32 = arith.constant 0 : i32
    %c0_i32_0 = arith.constant 0 : i32
    %c0_i32_1 = arith.constant 0 : i32
    return %c0_i32, %c0_i32_0 : i32, i32
  }
}

</mosaic_0001>

<llo_original>
// kernel: tpu_custom_call.1
$region0: #{tpu_custom_call.1}
  #allocation0 [shape = 'u32[]', space=smem, size = 0x4, offset = 0x4, fixed_abs, tag = 'smem constant byte address 0x4 - core index']
  #allocation1 [shape = 'u32[72,128]{1,0:T(1,128)}', space=vmem, size = 0x9000, scoped, tag = 'internal scratch']
  %s0 = inlined_call_operand.vmem [shape: f32[2,128], index: 0, kind: input, shape index: {}]
  %s1 = inlined_call_operand.vmem [shape: f32[128,256], index: 1, kind: input, shape index: {}]
  %s2 = inlined_call_operand.vmem [shape: f32[1,256], index: 2, kind: input, shape index: {}]
  %s3 = inlined_call_operand.hbm [shape: f32[256,256], index: 3, kind: input, shape index: {}]
  %s4 = inlined_call_operand.vmem [shape: f32[1,256], index: 4, kind: input, shape index: {}]
  %s5 = inlined_call_operand.hbm [shape: f32[256,256], index: 5, kind: input, shape index: {}]
  %s6 = inlined_call_operand.vmem [shape: f32[1,256], index: 6, kind: input, shape index: {}]
  %s7 = inlined_call_operand.vmem [shape: f32[256,64], index: 7, kind: input, shape index: {}]
  %s8 = inlined_call_operand.vmem [shape: f32[1,64], index: 8, kind: input, shape index: {}]
  %s9 = inlined_call_operand.hbm [shape: f32[2,64], index: 9, kind: output, shape index: {}]
  %s10 = sld [smem:[#allocation0]]
  $region54: #{tpu_custom_call.1} parent=0
    _
  %s12 = ssub.s32 1, %s10
  %s13 = scalar_select 0, %s12, %s10
  $region1: #{tpu_custom_call.1} parent=0
    #allocation2 [shape = 'u8[262144]{0}', space=vmem, size = 0x40000, scoped, tag = 'input window, operand 3, single buffered']
    #allocation3 [shape = 's32[1]{0}', space=sflag, size = 0x4, scoped, tag = 'scoped memory for tpu_custom_call.1']
    #allocation4 [shape = 's32[1]{0}', space=sflag, size = 0x4, scoped, tag = 'scoped memory for tpu_custom_call.1']
    #allocation5 [shape = 'u8[262144]{0}', space=vmem, size = 0x40000, scoped, tag = 'input window, operand 5, single buffered']
    #allocation6 [shape = 's32[1]{0}', space=sflag, size = 0x4, scoped, tag = 'scoped memory for tpu_custom_call.1']
    #allocation7 [shape = 'u8[1024]{0}', space=vmem, size = 0x400, scoped, tag = 'output window, operand 0, single buffered']
    %14 = vsyncpa [#allocation3], 0
    %15 = vsyncpa [#allocation6], 0
    %16 = vsyncpa [#allocation4], 0
    // Predicated region
    $region2: #{tpu_custom_call.1} parent=1 // pred_check
      _
    $region3: #{tpu_custom_call.1} parent=1 // pred_check_branch
      %18 = sbr.rel (0) target = $region5
    $region4: #{tpu_custom_call.1} parent=1 // pred_region
      _
    $region5: #{tpu_custom_call.1} parent=1 // pred_fallthru
      _
    // Predicated region
    $region6: #{tpu_custom_call.1} parent=1 // pred_check
      _
    $region7: #{tpu_custom_call.1} parent=1 // pred_check_branch
      %20 = sbr.rel (0) target = $region9
    $region8: #{tpu_custom_call.1} parent=1 // pred_region
      _
    $region9: #{tpu_custom_call.1} parent=1 // pred_fallthru
      _
    // Predicated region
    $region10: #{tpu_custom_call.1} parent=1 // pred_check
      _
    $region11: #{tpu_custom_call.1} parent=1 // pred_check_branch
      %22 = sbr.rel (0) target = $region13
    $region12: #{tpu_custom_call.1} parent=1 // pred_region
      _
    $region13: #{tpu_custom_call.1} parent=1 // pred_fallthru
      _
    // Predicated region
    $region14: #{tpu_custom_call.1} parent=1 // pred_check
      _
    $region15: #{tpu_custom_call.1} parent=1 // pred_check_branch
      %24 = sbr.rel (0) target = $region17
    $region16: #{tpu_custom_call.1} parent=1 // pred_region
      %26 = vsyncadd [#allocation3], 0
      %s27 = sshll.u32 %s3, 4
      %s28 = int_to_ptr.hbm [resolvable:$true] %s27
      %s29 = sshll.u32 [#allocation2], 4
      %s30 = int_to_ptr.vmem [resolvable:$true] %s29
      %35 = dma.hbm_to_vmem [thread:$0]  %s28, 8192, %s30, [#allocation3], 256, 256, 16
    $region17: #{tpu_custom_call.1} parent=1 // pred_fallthru
      _
    // Predicated region
    $region18: #{tpu_custom_call.1} parent=1 // pred_check
      _
    $region19: #{tpu_custom_call.1} parent=1 // pred_check_branch
      %37 = sbr.rel (0) target = $region21
    $region20: #{tpu_custom_call.1} parent=1 // pred_region
      _
    $region21: #{tpu_custom_call.1} parent=1 // pred_fallthru
      _
    // Predicated region
    $region22: #{tpu_custom_call.1} parent=1 // pred_check
      _
    $region23: #{tpu_custom_call.1} parent=1 // pred_check_branch
      %39 = sbr.rel (0) target = $region25
    $region24: #{tpu_custom_call.1} parent=1 // pred_region
      %41 = vsyncadd [#allocation6], 0
      %s42 = sshll.u32 %s5, 4
      %s43 = int_to_ptr.hbm [resolvable:$true] %s42
      %s44 = sshll.u32 [#allocation5], 4
      %s45 = int_to_ptr.vmem [resolvable:$true] %s44
      %50 = dma.hbm_to_vmem [thread:$0]  %s43, 8192, %s45, [#allocation6], 256, 256, 16
    $region25: #{tpu_custom_call.1} parent=1 // pred_fallthru
      _
    // Predicated region
    $region26: #{tpu_custom_call.1} parent=1 // pred_check
      _
    $region27: #{tpu_custom_call.1} parent=1 // pred_check_branch
      %52 = sbr.rel (0) target = $region29
    $region28: #{tpu_custom_call.1} parent=1 // pred_region
      _
    $region29: #{tpu_custom_call.1} parent=1 // pred_fallthru
      _
    // Predicated region
    $region30: #{tpu_custom_call.1} parent=1 // pred_check
      _
    $region31: #{tpu_custom_call.1} parent=1 // pred_check_branch
      %54 = sbr.rel (0) target = $region33
    $region32: #{tpu_custom_call.1} parent=1 // pred_region
      _
    $region33: #{tpu_custom_call.1} parent=1 // pred_fallthru
      _
    // Predicated region
    $region34: #{tpu_custom_call.1} parent=1 // pred_check
      _
    $region35: #{tpu_custom_call.1} parent=1 // pred_check_branch
      %56 = sbr.rel (0) target = $region37
    $region36: #{tpu_custom_call.1} parent=1 // pred_region
      _
    $region37: #{tpu_custom_call.1} parent=1 // pred_fallthru
      _
    // Predicated region
    $region38: #{tpu_custom_call.1} parent=1 // pred_check
      _
    $region39: #{tpu_custom_call.1} parent=1 // pred_check_branch
      %58 = sbr.rel (0) target = $region41
    $region40: #{tpu_custom_call.1} parent=1 // pred_region
      %60 = dma.done [#allocation3], 8192
    $region41: #{tpu_custom_call.1} parent=1 // pred_fallthru
      _
    // Predicated region
    $region42: #{tpu_custom_call.1} parent=1 // pred_check
      _
    $region43: #{tpu_custom_call.1} parent=1 // pred_check_branch
      %62 = sbr.rel (0) target = $region45
    $region44: #{tpu_custom_call.1} parent=1 // pred_region
      %64 = dma.done [#allocation6], 8192
    $region45: #{tpu_custom_call.1} parent=1 // pred_fallthru
      _
    %v65 = vld [vmem:[%s0] sm:$0x3]
    %v66 = vld [vmem:[%s1] sm:$0xff]
    %v67 = vld [vmem:[%s1 + $0x8] sm:$0xff]
    %v68 = vld [vmem:[%s1 + $0x10] sm:$0xff]
    %v69 = vld [vmem:[%s1 + $0x18] sm:$0xff]
    %v70 = vld [vmem:[%s1 + $0x20] sm:$0xff]
    %v71 = vld [vmem:[%s1 + $0x28] sm:$0xff]
    %v72 = vld [vmem:[%s1 + $0x30] sm:$0xff]
    %v73 = vld [vmem:[%s1 + $0x38] sm:$0xff]
    %v74 = vld [vmem:[%s1 + $0x40] sm:$0xff]
    %v75 = vld [vmem:[%s1 + $0x48] sm:$0xff]
    %v76 = vld [vmem:[%s1 + $0x50] sm:$0xff]
    %v77 = vld [vmem:[%s1 + $0x58] sm:$0xff]
    %v78 = vld [vmem:[%s1 + $0x60] sm:$0xff]
    %v79 = vld [vmem:[%s1 + $0x68] sm:$0xff]
    %v80 = vld [vmem:[%s1 + $0x70] sm:$0xff]
    %v81 = vld [vmem:[%s1 + $0x78] sm:$0xff]
    %v82 = vld [vmem:[%s1 + $0x80] sm:$0xff]
    %v83 = vld [vmem:[%s1 + $0x88] sm:$0xff]
    %v84 = vld [vmem:[%s1 + $0x90] sm:$0xff]
    %v85 = vld [vmem:[%s1 + $0x98] sm:$0xff]
    %v86 = vld [vmem:[%s1 + $0xa0] sm:$0xff]
    %v87 = vld [vmem:[%s1 + $0xa8] sm:$0xff]
    %v88 = vld [vmem:[%s1 + $0xb0] sm:$0xff]
    %v89 = vld [vmem:[%s1 + $0xb8] sm:$0xff]
    %v90 = vld [vmem:[%s1 + $0xc0] sm:$0xff]
    %v91 = vld [vmem:[%s1 + $0xc8] sm:$0xff]
    %v92 = vld [vmem:[%s1 + $0xd0] sm:$0xff]
    %v93 = vld [vmem:[%s1 + $0xd8] sm:$0xff]
    %v94 = vld [vmem:[%s1 + $0xe0] sm:$0xff]
    %v95 = vld [vmem:[%s1 + $0xe8] sm:$0xff]
    %v96 = vld [vmem:[%s1 + $0xf0] sm:$0xff]
    %v97 = vld [vmem:[%s1 + $0xf8] sm:$0xff]
    %v98 = vld [vmem:[%s2] sm:$0x3]
    %v100 = vperm.slane %v98, 0
    %v101 = vperm.slane %v98, 1
    %104 = vmatpush.msra.mxu0 %v96
    %105 = vmatpush.msra.mxu0 %v94
    %106 = vmatpush.msra.mxu0 %v92
    %107 = vmatpush.msra.mxu0 %v90
    %108 = vmatpush.msra.mxu0 %v88
    %109 = vmatpush.msra.mxu0 %v86
    %110 = vmatpush.msra.mxu0 %v84
    %111 = vmatpush.msra.mxu0 %v82
    %112 = vmatpush.msra.mxu0 %v80
    %113 = vmatpush.msra.mxu0 %v78
    %114 = vmatpush.msra.mxu0 %v76
    %115 = vmatpush.msra.mxu0 %v74
    %116 = vmatpush.msra.mxu0 %v72
    %117 = vmatpush.msra.mxu0 %v70
    %118 = vmatpush.msra.mxu0 %v68
    %119 = vmatpush.msra.mxu0 %v66
    %120 = vmatmul.f32.gmra.mxu0 %v65
    %v121 = vpop.f32.mrf.mxu0
    %v122 = vadd.f32 %v100, %v121
    %123 = vdwg.mxu0
    %124 = vmatpush.msra.mxu0 %v97
    %125 = vmatpush.msra.mxu0 %v95
    %126 = vmatpush.msra.mxu0 %v93
    %127 = vmatpush.msra.mxu0 %v91
    %128 = vmatpush.msra.mxu0 %v89
    %129 = vmatpush.msra.mxu0 %v87
    %130 = vmatpush.msra.mxu0 %v85
    %131 = vmatpush.msra.mxu0 %v83
    %132 = vmatpush.msra.mxu0 %v81
    %133 = vmatpush.msra.mxu0 %v79
    %134 = vmatpush.msra.mxu0 %v77
    %135 = vmatpush.msra.mxu0 %v75
    %136 = vmatpush.msra.mxu0 %v73
    %137 = vmatpush.msra.mxu0 %v71
    %138 = vmatpush.msra.mxu0 %v69
    %139 = vmatpush.msra.mxu0 %v67
    %140 = vmatmul.f32.gmra.mxu0 %v65
    %v141 = vpop.f32.mrf.mxu0
    %v142 = vadd.f32 %v101, %v141
    %143 = vdwg.mxu0
    %v144 = vmax.f32 %v122, 0.0
    %v145 = vmax.f32 %v142, 0.0
    %v146 = vld [vmem:[#allocation2] sm:$0xff]
    %v147 = vld [vmem:[#allocation2 + $0x8] sm:$0xff]
    %v148 = vld [vmem:[#allocation2 + $0x10] sm:$0xff]
    %v149 = vld [vmem:[#allocation2 + $0x18] sm:$0xff]
    %v150 = vld [vmem:[#allocation2 + $0x20] sm:$0xff]
    %v151 = vld [vmem:[#allocation2 + $0x28] sm:$0xff]
    %v152 = vld [vmem:[#allocation2 + $0x30] sm:$0xff]
    %v153 = vld [vmem:[#allocation2 + $0x38] sm:$0xff]
    %v154 = vld [vmem:[#allocation2 + $0x40] sm:$0xff]
    %v155 = vld [vmem:[#allocation2 + $0x48] sm:$0xff]
    %v156 = vld [vmem:[#allocation2 + $0x50] sm:$0xff]
    %v157 = vld [vmem:[#allocation2 + $0x58] sm:$0xff]
    %v158 = vld [vmem:[#allocation2 + $0x60] sm:$0xff]
    %v159 = vld [vmem:[#allocation2 + $0x68] sm:$0xff]
    %v160 = vld [vmem:[#allocation2 + $0x70] sm:$0xff]
    %v161 = vld [vmem:[#allocation2 + $0x78] sm:$0xff]
    %v162 = vld [vmem:[#allocation2 + $0x80] sm:$0xff]
    %v163 = vld [vmem:[#allocation2 + $0x88] sm:$0xff]
    %v164 = vld [vmem:[#allocation2 + $0x90] sm:$0xff]
    %v165 = vld [vmem:[#allocation2 + $0x98] sm:$0xff]
    %v166 = vld [vmem:[#allocation2 + $0xa0] sm:$0xff]
    %v167 = vld [vmem:[#allocation2 + $0xa8] sm:$0xff]
    %v168 = vld [vmem:[#allocation2 + $0xb0] sm:$0xff]
    %v169 = vld [vmem:[#allocation2 + $0xb8] sm:$0xff]
    %v170 = vld [vmem:[#allocation2 + $0xc0] sm:$0xff]
    %v171 = vld [vmem:[#allocation2 + $0xc8] sm:$0xff]
    %v172 = vld [vmem:[#allocation2 + $0xd0] sm:$0xff]
    %v173 = vld [vmem:[#allocation2 + $0xd8] sm:$0xff]
    %v174 = vld [vmem:[#allocation2 + $0xe0] sm:$0xff]
    %v175 = vld [vmem:[#allocation2 + $0xe8] sm:$0xff]
    %v176 = vld [vmem:[#allocation2 + $0xf0] sm:$0xff]
    %v177 = vld [vmem:[#allocation2 + $0xf8] sm:$0xff]
    %v178 = vld [vmem:[#allocation2 + $0x100] sm:$0xff]
    %v179 = vld [vmem:[#allocation2 + $0x108] sm:$0xff]
    %v180 = vld [vmem:[#allocation2 + $0x110] sm:$0xff]
    %v181 = vld [vmem:[#allocation2 + $0x118] sm:$0xff]
    %v182 = vld [vmem:[#allocation2 + $0x120] sm:$0xff]
    %v183 = vld [vmem:[#allocation2 + $0x128] sm:$0xff]
    %v184 = vld [vmem:[#allocation2 + $0x130] sm:$0xff]
    %v185 = vld [vmem:[#allocation2 + $0x138] sm:$0xff]
    %v186 = vld [vmem:[#allocation2 + $0x140] sm:$0xff]
    %v187 = vld [vmem:[#allocation2 + $0x148] sm:$0xff]
    %v188 = vld [vmem:[#allocation2 + $0x150] sm:$0xff]
    %v189 = vld [vmem:[#allocation2 + $0x158] sm:$0xff]
    %v190 = vld [vmem:[#allocation2 + $0x160] sm:$0xff]
    %v191 = vld [vmem:[#allocation2 + $0x168] sm:$0xff]
    %v192 = vld [vmem:[#allocation2 + $0x170] sm:$0xff]
    %v193 = vld [vmem:[#allocation2 + $0x178] sm:$0xff]
    %v194 = vld [vmem:[#allocation2 + $0x180] sm:$0xff]
    %v195 = vld [vmem:[#allocation2 + $0x188] sm:$0xff]
    %v196 = vld [vmem:[#allocation2 + $0x190] sm:$0xff]
    %v197 = vld [vmem:[#allocation2 + $0x198] sm:$0xff]
    %v198 = vld [vmem:[#allocation2 + $0x1a0] sm:$0xff]
    %v199 = vld [vmem:[#allocation2 + $0x1a8] sm:$0xff]
    %v200 = vld [vmem:[#allocation2 + $0x1b0] sm:$0xff]
    %v201 = vld [vmem:[#allocation2 + $0x1b8] sm:$0xff]
    %v202 = vld [vmem:[#allocation2 + $0x1c0] sm:$0xff]
    %v203 = vld [vmem:[#allocation2 + $0x1c8] sm:$0xff]
    %v204 = vld [vmem:[#allocation2 + $0x1d0] sm:$0xff]
    %v205 = vld [vmem:[#allocation2 + $0x1d8] sm:$0xff]
    %v206 = vld [vmem:[#allocation2 + $0x1e0] sm:$0xff]
    %v207 = vld [vmem:[#allocation2 + $0x1e8] sm:$0xff]
    %v208 = vld [vmem:[#allocation2 + $0x1f0] sm:$0xff]
    %v209 = vld [vmem:[#allocation2 + $0x1f8] sm:$0xff]
    %v210 = vld [vmem:[%s4] sm:$0x3]
    %v212 = vperm.slane %v210, 0
    %v213 = vperm.slane %v210, 1
    %216 = vmatpush.msra.mxu0 %v176
    %217 = vmatpush.msra.mxu0 %v174
    %218 = vmatpush.msra.mxu0 %v172
    %219 = vmatpush.msra.mxu0 %v170
    %220 = vmatpush.msra.mxu0 %v168
    %221 = vmatpush.msra.mxu0 %v166
    %222 = vmatpush.msra.mxu0 %v164
    %223 = vmatpush.msra.mxu0 %v162
    %224 = vmatpush.msra.mxu0 %v160
    %225 = vmatpush.msra.mxu0 %v158
    %226 = vmatpush.msra.mxu0 %v156
    %227 = vmatpush.msra.mxu0 %v154
    %228 = vmatpush.msra.mxu0 %v152
    %229 = vmatpush.msra.mxu0 %v150
    %230 = vmatpush.msra.mxu0 %v148
    %231 = vmatpush.msra.mxu0 %v146
    %232 = vmatmul.f32.gmra.mxu0 %v144
    %v233 = vpop.f32.mrf.mxu0
    %v234 = vadd.f32 %v212, %v233
    %235 = vdwg.mxu0
    %236 = vmatpush.msra.mxu0 %v208
    %237 = vmatpush.msra.mxu0 %v206
    %238 = vmatpush.msra.mxu0 %v204
    %239 = vmatpush.msra.mxu0 %v202
    %240 = vmatpush.msra.mxu0 %v200
    %241 = vmatpush.msra.mxu0 %v198
    %242 = vmatpush.msra.mxu0 %v196
    %243 = vmatpush.msra.mxu0 %v194
    %244 = vmatpush.msra.mxu0 %v192
    %245 = vmatpush.msra.mxu0 %v190
    %246 = vmatpush.msra.mxu0 %v188
    %247 = vmatpush.msra.mxu0 %v186
    %248 = vmatpush.msra.mxu0 %v184
    %249 = vmatpush.msra.mxu0 %v182
    %250 = vmatpush.msra.mxu0 %v180
    %251 = vmatpush.msra.mxu0 %v178
    %252 = vmatmul.f32.gmra.mxu0 %v145
    %v253 = vpop.f32.mrf.mxu0
    %v254 = vadd.f32 %v234, %v253
    %255 = vdwg.mxu0
    %256 = vmatpush.msra.mxu0 %v177
    %257 = vmatpush.msra.mxu0 %v175
    %258 = vmatpush.msra.mxu0 %v173
    %259 = vmatpush.msra.mxu0 %v171
    %260 = vmatpush.msra.mxu0 %v169
    %261 = vmatpush.msra.mxu0 %v167
    %262 = vmatpush.msra.mxu0 %v165
    %263 = vmatpush.msra.mxu0 %v163
    %264 = vmatpush.msra.mxu0 %v161
    %265 = vmatpush.msra.mxu0 %v159
    %266 = vmatpush.msra.mxu0 %v157
    %267 = vmatpush.msra.mxu0 %v155
    %268 = vmatpush.msra.mxu0 %v153
    %269 = vmatpush.msra.mxu0 %v151
    %270 = vmatpush.msra.mxu0 %v149
    %271 = vmatpush.msra.mxu0 %v147
    %272 = vmatmul.f32.gmra.mxu0 %v144
    %v273 = vpop.f32.mrf.mxu0
    %v274 = vadd.f32 %v213, %v273
    %275 = vdwg.mxu0
    %276 = vmatpush.msra.mxu0 %v209
    %277 = vmatpush.msra.mxu0 %v207
    %278 = vmatpush.msra.mxu0 %v205
    %279 = vmatpush.msra.mxu0 %v203
    %280 = vmatpush.msra.mxu0 %v201
    %281 = vmatpush.msra.mxu0 %v199
    %282 = vmatpush.msra.mxu0 %v197
    %283 = vmatpush.msra.mxu0 %v195
    %284 = vmatpush.msra.mxu0 %v193
    %285 = vmatpush.msra.mxu0 %v191
    %286 = vmatpush.msra.mxu0 %v189
    %287 = vmatpush.msra.mxu0 %v187
    %288 = vmatpush.msra.mxu0 %v185
    %289 = vmatpush.msra.mxu0 %v183
    %290 = vmatpush.msra.mxu0 %v181
    %291 = vmatpush.msra.mxu0 %v179
    %292 = vmatmul.f32.gmra.mxu0 %v145
    %v293 = vpop.f32.mrf.mxu0
    %v294 = vadd.f32 %v274, %v293
    %295 = vdwg.mxu0
    %v296 = vmax.f32 %v254, 0.0
    %v297 = vmax.f32 %v294, 0.0
    %v298 = vld [vmem:[#allocation5] sm:$0xff]
    %v299 = vld [vmem:[#allocation5 + $0x8] sm:$0xff]
    %v300 = vld [vmem:[#allocation5 + $0x10] sm:$0xff]
    %v301 = vld [vmem:[#allocation5 + $0x18] sm:$0xff]
    %v302 = vld [vmem:[#allocation5 + $0x20] sm:$0xff]
    %v303 = vld [vmem:[#allocation5 + $0x28] sm:$0xff]
    %v304 = vld [vmem:[#allocation5 + $0x30] sm:$0xff]
    %v305 = vld [vmem:[#allocation5 + $0x38] sm:$0xff]
    %v306 = vld [vmem:[#allocation5 + $0x40] sm:$0xff]
    %v307 = vld [vmem:[#allocation5 + $0x48] sm:$0xff]
    %v308 = vld [vmem:[#allocation5 + $0x50] sm:$0xff]
    %v309 = vld [vmem:[#allocation5 + $0x58] sm:$0xff]
    %v310 = vld [vmem:[#allocation5 + $0x60] sm:$0xff]
    %v311 = vld [vmem:[#allocation5 + $0x68] sm:$0xff]
    %v312 = vld [vmem:[#allocation5 + $0x70] sm:$0xff]
    %v313 = vld [vmem:[#allocation5 + $0x78] sm:$0xff]
    %v314 = vld [vmem:[#allocation5 + $0x80] sm:$0xff]
    %v315 = vld [vmem:[#allocation5 + $0x88] sm:$0xff]
    %v316 = vld [vmem:[#allocation5 + $0x90] sm:$0xff]
    %v317 = vld [vmem:[#allocation5 + $0x98] sm:$0xff]
    %v318 = vld [vmem:[#allocation5 + $0xa0] sm:$0xff]
    %v319 = vld [vmem:[#allocation5 + $0xa8] sm:$0xff]
    %v320 = vld [vmem:[#allocation5 + $0xb0] sm:$0xff]
    %v321 = vld [vmem:[#allocation5 + $0xb8] sm:$0xff]
    %v322 = vld [vmem:[#allocation5 + $0xc0] sm:$0xff]
    %v323 = vld [vmem:[#allocation5 + $0xc8] sm:$0xff]
    %v324 = vld [vmem:[#allocation5 + $0xd0] sm:$0xff]
    %v325 = vld [vmem:[#allocation5 + $0xd8] sm:$0xff]
    %v326 = vld [vmem:[#allocation5 + $0xe0] sm:$0xff]
    %v327 = vld [vmem:[#allocation5 + $0xe8] sm:$0xff]
    %v328 = vld [vmem:[#allocation5 + $0xf0] sm:$0xff]
    %v329 = vld [vmem:[#allocation5 + $0xf8] sm:$0xff]
    %v330 = vld [vmem:[#allocation5 + $0x100] sm:$0xff]
    %v331 = vld [vmem:[#allocation5 + $0x108] sm:$0xff]
    %v332 = vld [vmem:[#allocation5 + $0x110] sm:$0xff]
    %v333 = vld [vmem:[#allocation5 + $0x118] sm:$0xff]
    %v334 = vld [vmem:[#allocation5 + $0x120] sm:$0xff]
    %v335 = vld [vmem:[#allocation5 + $0x128] sm:$0xff]
    %v336 = vld [vmem:[#allocation5 + $0x130] sm:$0xff]
    %v337 = vld [vmem:[#allocation5 + $0x138] sm:$0xff]
    %v338 = vld [vmem:[#allocation5 + $0x140] sm:$0xff]
    %v339 = vld [vmem:[#allocation5 + $0x148] sm:$0xff]
    %v340 = vld [vmem:[#allocation5 + $0x150] sm:$0xff]
    %v341 = vld [vmem:[#allocation5 + $0x158] sm:$0xff]
    %v342 = vld [vmem:[#allocation5 + $0x160] sm:$0xff]
    %v343 = vld [vmem:[#allocation5 + $0x168] sm:$0xff]
    %v344 = vld [vmem:[#allocation5 + $0x170] sm:$0xff]
    %v345 = vld [vmem:[#allocation5 + $0x178] sm:$0xff]
    %v346 = vld [vmem:[#allocation5 + $0x180] sm:$0xff]
    %v347 = vld [vmem:[#allocation5 + $0x188] sm:$0xff]
    %v348 = vld [vmem:[#allocation5 + $0x190] sm:$0xff]
    %v349 = vld [vmem:[#allocation5 + $0x198] sm:$0xff]
    %v350 = vld [vmem:[#allocation5 + $0x1a0] sm:$0xff]
    %v351 = vld [vmem:[#allocation5 + $0x1a8] sm:$0xff]
    %v352 = vld [vmem:[#allocation5 + $0x1b0] sm:$0xff]
    %v353 = vld [vmem:[#allocation5 + $0x1b8] sm:$0xff]
    %v354 = vld [vmem:[#allocation5 + $0x1c0] sm:$0xff]
    %v355 = vld [vmem:[#allocation5 + $0x1c8] sm:$0xff]
    %v356 = vld [vmem:[#allocation5 + $0x1d0] sm:$0xff]
    %v357 = vld [vmem:[#allocation5 + $0x1d8] sm:$0xff]
    %v358 = vld [vmem:[#allocation5 + $0x1e0] sm:$0xff]
    %v359 = vld [vmem:[#allocation5 + $0x1e8] sm:$0xff]
    %v360 = vld [vmem:[#allocation5 + $0x1f0] sm:$0xff]
    %v361 = vld [vmem:[#allocation5 + $0x1f8] sm:$0xff]
    %v362 = vld [vmem:[%s6] sm:$0x3]
    %v364 = vperm.slane %v362, 0
    %v365 = vperm.slane %v362, 1
    %368 = vmatpush.msra.mxu0 %v328
    %369 = vmatpush.msra.mxu0 %v326
    %370 = vmatpush.msra.mxu0 %v324
    %371 = vmatpush.msra.mxu0 %v322
    %372 = vmatpush.msra.mxu0 %v320
    %373 = vmatpush.msra.mxu0 %v318
    %374 = vmatpush.msra.mxu0 %v316
    %375 = vmatpush.msra.mxu0 %v314
    %376 = vmatpush.msra.mxu0 %v312
    %377 = vmatpush.msra.mxu0 %v310
    %378 = vmatpush.msra.mxu0 %v308
    %379 = vmatpush.msra.mxu0 %v306
    %380 = vmatpush.msra.mxu0 %v304
    %381 = vmatpush.msra.mxu0 %v302
    %382 = vmatpush.msra.mxu0 %v300
    %383 = vmatpush.msra.mxu0 %v298
    %384 = vmatmul.f32.gmra.mxu0 %v296
    %v385 = vpop.f32.mrf.mxu0
    %v386 = vadd.f32 %v364, %v385
    %387 = vdwg.mxu0
    %388 = vmatpush.msra.mxu0 %v360
    %389 = vmatpush.msra.mxu0 %v358
    %390 = vmatpush.msra.mxu0 %v356
    %391 = vmatpush.msra.mxu0 %v354
    %392 = vmatpush.msra.mxu0 %v352
    %393 = vmatpush.msra.mxu0 %v350
    %394 = vmatpush.msra.mxu0 %v348
    %395 = vmatpush.msra.mxu0 %v346
    %396 = vmatpush.msra.mxu0 %v344
    %397 = vmatpush.msra.mxu0 %v342
    %398 = vmatpush.msra.mxu0 %v340
    %399 = vmatpush.msra.mxu0 %v338
    %400 = vmatpush.msra.mxu0 %v336
    %401 = vmatpush.msra.mxu0 %v334
    %402 = vmatpush.msra.mxu0 %v332
    %403 = vmatpush.msra.mxu0 %v330
    %404 = vmatmul.f32.gmra.mxu0 %v297
    %v405 = vpop.f32.mrf.mxu0
    %v406 = vadd.f32 %v386, %v405
    %407 = vdwg.mxu0
    %408 = vmatpush.msra.mxu0 %v329
    %409 = vmatpush.msra.mxu0 %v327
    %410 = vmatpush.msra.mxu0 %v325
    %411 = vmatpush.msra.mxu0 %v323
    %412 = vmatpush.msra.mxu0 %v321
    %413 = vmatpush.msra.mxu0 %v319
    %414 = vmatpush.msra.mxu0 %v317
    %415 = vmatpush.msra.mxu0 %v315
    %416 = vmatpush.msra.mxu0 %v313
    %417 = vmatpush.msra.mxu0 %v311
    %418 = vmatpush.msra.mxu0 %v309
    %419 = vmatpush.msra.mxu0 %v307
    %420 = vmatpush.msra.mxu0 %v305
    %421 = vmatpush.msra.mxu0 %v303
    %422 = vmatpush.msra.mxu0 %v301
    %423 = vmatpush.msra.mxu0 %v299
    %424 = vmatmul.f32.gmra.mxu0 %v296
    %v425 = vpop.f32.mrf.mxu0
    %v426 = vadd.f32 %v365, %v425
    %427 = vdwg.mxu0
    %428 = vmatpush.msra.mxu0 %v361
    %429 = vmatpush.msra.mxu0 %v359
    %430 = vmatpush.msra.mxu0 %v357
    %431 = vmatpush.msra.mxu0 %v355
    %432 = vmatpush.msra.mxu0 %v353
    %433 = vmatpush.msra.mxu0 %v351
    %434 = vmatpush.msra.mxu0 %v349
    %435 = vmatpush.msra.mxu0 %v347
    %436 = vmatpush.msra.mxu0 %v345
    %437 = vmatpush.msra.mxu0 %v343
    %438 = vmatpush.msra.mxu0 %v341
    %439 = vmatpush.msra.mxu0 %v339
    %440 = vmatpush.msra.mxu0 %v337
    %441 = vmatpush.msra.mxu0 %v335
    %442 = vmatpush.msra.mxu0 %v333
    %443 = vmatpush.msra.mxu0 %v331
    %444 = vmatmul.f32.gmra.mxu0 %v297
    %v445 = vpop.f32.mrf.mxu0
    %v446 = vadd.f32 %v426, %v445
    %447 = vdwg.mxu0
    %v448 = vmax.f32 %v406, 0.0
    %v449 = vmax.f32 %v446, 0.0
    %v450 = vld [vmem:[%s7] sm:$0xff]
    %v451 = vld [vmem:[%s7 + $0x8] sm:$0xff]
    %v452 = vld [vmem:[%s7 + $0x10] sm:$0xff]
    %v453 = vld [vmem:[%s7 + $0x18] sm:$0xff]
    %v454 = vld [vmem:[%s7 + $0x20] sm:$0xff]
    %v455 = vld [vmem:[%s7 + $0x28] sm:$0xff]
    %v456 = vld [vmem:[%s7 + $0x30] sm:$0xff]
    %v457 = vld [vmem:[%s7 + $0x38] sm:$0xff]
    %v458 = vld [vmem:[%s7 + $0x40] sm:$0xff]
    %v459 = vld [vmem:[%s7 + $0x48] sm:$0xff]
    %v460 = vld [vmem:[%s7 + $0x50] sm:$0xff]
    %v461 = vld [vmem:[%s7 + $0x58] sm:$0xff]
    %v462 = vld [vmem:[%s7 + $0x60] sm:$0xff]
    %v463 = vld [vmem:[%s7 + $0x68] sm:$0xff]
    %v464 = vld [vmem:[%s7 + $0x70] sm:$0xff]
    %v465 = vld [vmem:[%s7 + $0x78] sm:$0xff]
    %v466 = vld [vmem:[%s7 + $0x80] sm:$0xff]
    %v467 = vld [vmem:[%s7 + $0x88] sm:$0xff]
    %v468 = vld [vmem:[%s7 + $0x90] sm:$0xff]
    %v469 = vld [vmem:[%s7 + $0x98] sm:$0xff]
    %v470 = vld [vmem:[%s7 + $0xa0] sm:$0xff]
    %v471 = vld [vmem:[%s7 + $0xa8] sm:$0xff]
    %v472 = vld [vmem:[%s7 + $0xb0] sm:$0xff]
    %v473 = vld [vmem:[%s7 + $0xb8] sm:$0xff]
    %v474 = vld [vmem:[%s7 + $0xc0] sm:$0xff]
    %v475 = vld [vmem:[%s7 + $0xc8] sm:$0xff]
    %v476 = vld [vmem:[%s7 + $0xd0] sm:$0xff]
    %v477 = vld [vmem:[%s7 + $0xd8] sm:$0xff]
    %v478 = vld [vmem:[%s7 + $0xe0] sm:$0xff]
    %v479 = vld [vmem:[%s7 + $0xe8] sm:$0xff]
    %v480 = vld [vmem:[%s7 + $0xf0] sm:$0xff]
    %v481 = vld [vmem:[%s7 + $0xf8] sm:$0xff]
    %v482 = vld [vmem:[%s8] sm:$0x1]
    %v484 = vperm.slane %v482, 0
    %486 = vmatpush.msra.mxu0 %v465
    %487 = vmatpush.msra.mxu0 %v464
    %488 = vmatpush.msra.mxu0 %v463
    %489 = vmatpush.msra.mxu0 %v462
    %490 = vmatpush.msra.mxu0 %v461
    %491 = vmatpush.msra.mxu0 %v460
    %492 = vmatpush.msra.mxu0 %v459
    %493 = vmatpush.msra.mxu0 %v458
    %494 = vmatpush.msra.mxu0 %v457
    %495 = vmatpush.msra.mxu0 %v456
    %496 = vmatpush.msra.mxu0 %v455
    %497 = vmatpush.msra.mxu0 %v454
    %498 = vmatpush.msra.mxu0 %v453
    %499 = vmatpush.msra.mxu0 %v452
    %500 = vmatpush.msra.mxu0 %v451
    %501 = vmatpush.msra.mxu0 %v450
    %502 = vmatmul.f32.gmra.mxu0 %v448
    %v503 = vpop.f32.mrf.mxu0
    %v504 = vadd.f32 %v484, %v503
    %505 = vdwg.mxu0
    %506 = vmatpush.msra.mxu0 %v481
    %507 = vmatpush.msra.mxu0 %v480
    %508 = vmatpush.msra.mxu0 %v479
    %509 = vmatpush.msra.mxu0 %v478
    %510 = vmatpush.msra.mxu0 %v477
    %511 = vmatpush.msra.mxu0 %v476
    %512 = vmatpush.msra.mxu0 %v475
    %513 = vmatpush.msra.mxu0 %v474
    %514 = vmatpush.msra.mxu0 %v473
    %515 = vmatpush.msra.mxu0 %v472
    %516 = vmatpush.msra.mxu0 %v471
    %517 = vmatpush.msra.mxu0 %v470
    %518 = vmatpush.msra.mxu0 %v469
    %519 = vmatpush.msra.mxu0 %v468
    %520 = vmatpush.msra.mxu0 %v467
    %521 = vmatpush.msra.mxu0 %v466
    %522 = vmatmul.f32.gmra.mxu0 %v449
    %v523 = vpop.f32.mrf.mxu0
    %v524 = vadd.f32 %v504, %v523
    %525 = vdwg.mxu0
    %vm526 = vcmask 517120
    %527 = vst.msk [vmem:[#allocation7] sm:$0x3] %vm526, %v524
    // Predicated region
    $region46: #{tpu_custom_call.1} parent=1 // pred_check
      _
    $region47: #{tpu_custom_call.1} parent=1 // pred_check_branch
      %529 = sbr.rel (0) target = $region49
    $region48: #{tpu_custom_call.1} parent=1 // pred_region
      %531 = vsyncadd [#allocation4], 0
      %s533 = sshll.u32 [#allocation7], 4
      %s534 = int_to_ptr.vmem [resolvable:$true] %s533
      %s535 = sshll.u32 %s9, 4
      %s536 = int_to_ptr.hbm [resolvable:$true] %s535
      %538 = dma.vmem_to_hbm [thread:$0]  %s534, 32, %s536, [#allocation4]
    $region49: #{tpu_custom_call.1} parent=1 // pred_fallthru
      _
    // Predicated region
    $region50: #{tpu_custom_call.1} parent=1 // pred_check
      _
    $region51: #{tpu_custom_call.1} parent=1 // pred_check_branch
      %540 = sbr.rel (0) target = $region53
    $region52: #{tpu_custom_call.1} parent=1 // pred_region
      %542 = dma.done [#allocation4], 32
    $region53: #{tpu_custom_call.1} parent=1 // pred_fallthru
      _
    %543 = vsyncpa [#allocation3], 1
    %544 = vsyncpa [#allocation6], 1
    %545 = vsyncpa [#allocation4], 1

</llo_original>
